<compile_context>
chip_gen: v5e
topology: v5e:2x2
jax: 0.10.0
libtpu: 0.0.40
codegen_flags: <defaults>
</compile_context>

<pallas_src>
import abc
from typing import Callable, Generic, List, TypeVar

import jax
import jax.numpy as jnp
from jax.experimental import pallas as pl
from jax.experimental.pallas import tpu as pltpu

W = TypeVar("W")


# ----------------------------- Awaitable glue -------------------------------
class Awaitable(abc.ABC, Generic[W]):
    def __init__(self) -> None:
        self._callbacks: List[Callable[[W], W]] = []

    @abc.abstractmethod
    def _wait_impl(self) -> W:
        ...

    def wait(self) -> W:
        ret: W = self._wait_impl()
        for callback in self.callbacks:
            ret = callback(ret)
        return ret

    @property
    def callbacks(self) -> List[Callable[[W], W]]:
        return self._callbacks


class LazyAwaitable(Awaitable[W]):
    def __init__(self) -> None:
        super().__init__()
        self._result = None


class _ValueAwaitable(LazyAwaitable[W]):
    def __init__(self, value: W) -> None:
        super().__init__()
        self._value = value

    def _wait_impl(self) -> W:
        return self._value


class ShardedModuleContext:
    pass


class EmptyContext(ShardedModuleContext):
    pass


# ------------------------------ Pallas kernel --------------------------------
def _sharded_linear_kernel(x_ref, w_ref, b_ref, o_ref, acc_ref):
    # Grid: (shard/N-tile, K-tile). K is the innermost (reduction) axis.
    # x_ref   : (B, TK)            — K-slice of the replicated input
    # w_ref   : (1, TK, D_SHARD)   — this shard's K-slice of the weight
    # b_ref   : (1, 1, D_SHARD)    — this shard's bias (K-invariant block)
    # o_ref   : (B, D_SHARD)       — lane-dense column slab of the final output
    # acc_ref : (B, D_SHARD) f32   — VMEM accumulator, resident across K
    k = pl.program_id(1)

    @pl.when(k == 0)
    def _init():
        acc_ref[...] = jnp.zeros_like(acc_ref)

    acc_ref[...] += jnp.dot(
        x_ref[...], w_ref[0], preferred_element_type=jnp.float32
    )

    @pl.when(k == pl.num_programs(1) - 1)
    def _finalize():
        # Bias added exactly once, after the full K reduction.
        o_ref[...] = (acc_ref[...] + b_ref[0]).astype(o_ref.dtype)


def _pick_tk(d_in: int) -> int:
    # Largest "nice" K tile that divides d_in (keeps double-buffered weight
    # tiles comfortably inside the scoped VMEM limit at production sizes).
    for cand in (2048, 1024, 512, 256, 128):
        if d_in % cand == 0:
            return cand
    return d_in  # small / odd d_in: whole-K in one step


def sharded_linear_compute(x, weight, bias):
    """Column-wise sharded linear, fused into one lane-dense matmul kernel.

    x      : [B, D_IN]                    float32
    weight : [NUM_SHARDS, D_IN, D_SHARD]  float32  (per-shard storage)
    bias   : [NUM_SHARDS, 1, D_SHARD]     float32
    returns: [B, NUM_SHARDS * D_SHARD]    float32  (already gathered / lane-dense)
    """
    num_shards, d_in, d_shard = weight.shape
    b = x.shape[0]
    d_out = num_shards * d_shard

    tk = _pick_tk(d_in)
    k_tiles = d_in // tk

    itemsize = jnp.dtype(x.dtype).itemsize
    cost = pl.CostEstimate(
        flops=2 * b * d_in * d_out,
        transcendentals=0,
        bytes_accessed=(x.size + weight.size + bias.size) * itemsize
        + b * d_out * itemsize,
    )

    return pl.pallas_call(
        _sharded_linear_kernel,
        out_shape=jax.ShapeDtypeStruct((b, d_out), x.dtype),
        grid_spec=pltpu.PrefetchScalarGridSpec(
            num_scalar_prefetch=0,
            grid=(num_shards, k_tiles),
            in_specs=[
                # x: K-sliced, replicated across shards.
                pl.BlockSpec((b, tk), lambda s, k: (0, k)),
                # weight: this shard's K-slice.
                pl.BlockSpec((1, tk, d_shard), lambda s, k: (s, k, 0)),
                # bias: K-invariant block -> DMA'd once per shard.
                pl.BlockSpec((1, 1, d_shard), lambda s, k: (s, 0, 0)),
            ],
            # Lane-dense output: shard s writes columns [s*d_shard, (s+1)*d_shard).
            # Block index is K-invariant -> output stays resident as accumulator.
            out_specs=pl.BlockSpec((b, d_shard), lambda s, k: (0, s)),
            scratch_shapes=[pltpu.VMEM((b, d_shard), jnp.float32)],
        ),
        compiler_params=pltpu.CompilerParams(
            # Shards are independent -> parallel (splits across v7x's 2 TCs).
            # K is a reduction into the resident output -> arbitrary.
            dimension_semantics=("parallel", "arbitrary"),
        ),
        cost_estimate=cost,
    )(x, weight, bias)


# --------------------------- ShardedModule port -------------------------------
class ShardedModule(abc.ABC, Generic[W]):
    """JAX port of torchrec ShardedModule: forward = input_dist -> compute -> output_dist."""

    def create_context(self) -> ShardedModuleContext:
        return EmptyContext()

    @abc.abstractmethod
    def input_dist(self, ctx, *input, **kwargs) -> Awaitable:
        ...

    @abc.abstractmethod
    def compute(self, ctx, dist_input):
        ...

    @abc.abstractmethod
    def output_dist(self, ctx, output) -> LazyAwaitable:
        ...

    def compute_and_output_dist(self, ctx, inp) -> LazyAwaitable:
        output = self.compute(ctx, inp)
        return self.output_dist(ctx, output)

    def forward(self, *input, **kwargs) -> LazyAwaitable:
        ctx = self.create_context()
        dist_input = self.input_dist(ctx, *input, **kwargs).wait()
        return self.compute_and_output_dist(ctx, dist_input)

    def __call__(self, *input, **kwargs) -> LazyAwaitable:
        return self.forward(*input, **kwargs)


class ShardedLinear(ShardedModule):
    """Column-wise sharded linear: weight split along output features across shards."""

    def __init__(self, d_in: int, d_out: int, num_shards: int, key) -> None:
        assert d_out % num_shards == 0
        self.num_shards = num_shards
        self.d_shard = d_out // num_shards
        k_w, k_b = jax.random.split(key)
        # Deterministic synthetic parameters (no checkpoint load).
        self.weight = (
            jax.random.normal(k_w, (num_shards, d_in, self.d_shard), jnp.float32) * 0.02
        )
        self.bias = (
            jax.random.normal(k_b, (num_shards, 1, self.d_shard), jnp.float32) * 0.01
        )

    def input_dist(self, ctx, x) -> Awaitable:
        # Data-parallel -> model-parallel: replicate the dense input to all shards.
        # TODO(synk): in true distributed torchrec this is an all-to-all over ranks.
        return _ValueAwaitable(x)

    def compute(self, ctx, dist_input):
        return sharded_linear_compute(dist_input, self.weight, self.bias)

    def output_dist(self, ctx, output) -> LazyAwaitable:
        # Model-parallel -> data-parallel gather: the Pallas kernel already wrote
        # each shard's columns into the lane-dense [B, D_OUT] slab, so this is an
        # identity (no transpose/reshape HBM round trip).
        # TODO(synk): in true distributed torchrec this is an all-gather over ranks.
        return _ValueAwaitable(output)


# ----------------------------------- main -------------------------------------
if __name__ == "__main__":
    # Small but TPU-friendly shapes: B=8 (sublanes), D_SHARD=128 (full lanes).
    BATCH, D_IN, D_OUT, NUM_SHARDS = 8, 128, 256, 2

    key = jax.random.PRNGKey(0)
    k_x, k_p = jax.random.split(key)
    x = jax.random.normal(k_x, (BATCH, D_IN), jnp.float32)

    module = ShardedLinear(D_IN, D_OUT, NUM_SHARDS, k_p)

    out = module(x).wait()          # LazyAwaitable -> concrete value
    out = jax.block_until_ready(out)

    # Reference check (plain JAX) of the full sharded pipeline.
    w_full = jnp.transpose(module.weight, (1, 0, 2)).reshape(D_IN, D_OUT)
    b_full = module.bias[:, 0, :].reshape(D_OUT)
    ref = x @ w_full + b_full
    assert out.shape == (BATCH, D_OUT)
    assert jnp.allclose(out, ref, atol=1e-4, rtol=1e-4)

    print("KERNEL_OK")
</pallas_src>

<mosaic_0001>
module attributes {stable_mosaic.version = 11 : i64} {
  func.func @_sharded_linear_kernel(%arg0: i32, %arg1: i32, %arg2: memref<8x128xf32, #tpu.memory_space<vmem>>, %arg3: memref<1x128x128xf32, #tpu.memory_space<vmem>>, %arg4: memref<1x1x128xf32, #tpu.memory_space<vmem>>, %arg5: memref<8x128xf32, #tpu.memory_space<vmem>>, %arg6: memref<8x128xf32, #tpu.memory_space<vmem>>) attributes {dimension_semantics = [#tpu.dimension_semantics<parallel>, #tpu.dimension_semantics<arbitrary>], iteration_bounds = array<i64: 2, 1>, scalar_prefetch = 0 : i64, scratch_operands = 1 : i64, tpu.core_type = #tpu.core_type<tc>, window_params = [{transform_indices = @transform_0, window_bounds = array<i64: 8, 128>}, {transform_indices = @transform_1, window_bounds = array<i64: 1, 128, 128>}, {transform_indices = @transform_2, window_bounds = array<i64: 1, 1, 128>}, {transform_indices = @transform_3, window_bounds = array<i64: 8, 128>}]} {
    %c0_i32 = arith.constant 0 : i32
    %0 = arith.cmpi eq, %arg1, %c0_i32 : i32
    %1 = arith.extui %0 : i1 to i32
    %c0_i32_0 = arith.constant 0 : i32
    %2 = arith.cmpi ne, %1, %c0_i32_0 : i32
    scf.if %2 {
      %cst_11 = arith.constant 0.000000e+00 : f32
      %13 = vector.broadcast %cst_11 : f32 to vector<8x128xf32>
      %c0_12 = arith.constant 0 : index
      %c0_13 = arith.constant 0 : index
      %14 = vector.load %arg6[%c0_12, %c0_13] : memref<8x128xf32, #tpu.memory_space<vmem>>, vector<8x128xf32>
      tpu.vector_store %arg6[%c0_12, %c0_13], %13 {strides = array<i32>} : memref<8x128xf32, #tpu.memory_space<vmem>>, vector<8x128xf32>,
    } else {
    }
    %c0 = arith.constant 0 : index
    %c0_1 = arith.constant 0 : index
    %3 = vector.load %arg6[%c0, %c0_1] : memref<8x128xf32, #tpu.memory_space<vmem>>, vector<8x128xf32>
    %c0_2 = arith.constant 0 : index
    %c0_3 = arith.constant 0 : index
    %4 = vector.load %arg2[%c0_2, %c0_3] : memref<8x128xf32, #tpu.memory_space<vmem>>, vector<8x128xf32>
    %c0_4 = arith.constant 0 : index
    %c0_5 = arith.constant 0 : index
    %c0_6 = arith.constant 0 : index
    %5 = vector.load %arg3[%c0_4, %c0_5, %c0_6] : memref<1x128x128xf32, #tpu.memory_space<vmem>>, vector<1x128x128xf32>
    %6 = vector.shape_cast %5 : vector<1x128x128xf32> to vector<128x128xf32>
    %cst = arith.constant dense<0.000000e+00> : vector<8x128xf32>
    %7 = tpu.matmul %4, %6, %cst {dimension_numbers = #tpu.dot_dimension_numbers<[1], [0], [0], [1], [0, 0, 1, 1], [], []>} : vector<8x128xf32>, vector<128x128xf32>, vector<8x128xf32> -> vector<8x128xf32>
    %8 = arith.addf %3, %7 : vector<8x128xf32>
    %c0_7 = arith.constant 0 : index
    %c0_8 = arith.constant 0 : index
    %9 = vector.load %arg6[%c0_7, %c0_8] : memref<8x128xf32, #tpu.memory_space<vmem>>, vector<8x128xf32>
    tpu.vector_store %arg6[%c0_7, %c0_8], %8 {strides = array<i32>} : memref<8x128xf32, #tpu.memory_space<vmem>>, vector<8x128xf32>,
    %c0_i32_9 = arith.constant 0 : i32
    %10 = arith.cmpi eq, %arg1, %c0_i32_9 : i32
    %11 = arith.extui %10 : i1 to i32
    %c0_i32_10 = arith.constant 0 : i32
    %12 = arith.cmpi ne, %11, %c0_i32_10 : i32
    scf.if %12 {
      %c0_11 = arith.constant 0 : index
      %c0_12 = arith.constant 0 : index
      %13 = vector.load %arg6[%c0_11, %c0_12] : memref<8x128xf32, #tpu.memory_space<vmem>>, vector<8x128xf32>
      %c0_13 = arith.constant 0 : index
      %c0_14 = arith.constant 0 : index
      %c0_15 = arith.constant 0 : index
      %14 = vector.load %arg4[%c0_13, %c0_14, %c0_15] : memref<1x1x128xf32, #tpu.memory_space<vmem>>, vector<1x1x128xf32>
      %15 = vector.shape_cast %14 : vector<1x1x128xf32> to vector<1x128xf32>
      %16 = vector.broadcast %15 : vector<1x128xf32> to vector<8x128xf32>
      %17 = arith.addf %13, %16 : vector<8x128xf32>
      %c0_16 = arith.constant 0 : index
      %c0_17 = arith.constant 0 : index
      %18 = vector.load %arg5[%c0_16, %c0_17] : memref<8x128xf32, #tpu.memory_space<vmem>>, vector<8x128xf32>
      tpu.vector_store %arg5[%c0_16, %c0_17], %17 {strides = array<i32>} : memref<8x128xf32, #tpu.memory_space<vmem>>, vector<8x128xf32>,
    } else {
    }
    return
  }
  func.func @transform_0(%arg0: i32, %arg1: i32) -> (i32, i32) {
    %c0_i32 = arith.constant 0 : i32
    %c0_i32_0 = arith.constant 0 : i32
    return %c0_i32, %arg1 : i32, i32
  }
  func.func @transform_1(%arg0: i32, %arg1: i32) -> (i32, i32, i32) {
    %c0_i32 = arith.constant 0 : i32
    %c0_i32_0 = arith.constant 0 : i32
    return %arg0, %arg1, %c0_i32 : i32, i32, i32
  }
  func.func @transform_2(%arg0: i32, %arg1: i32) -> (i32, i32, i32) {
    %c0_i32 = arith.constant 0 : i32
    %c0_i32_0 = arith.constant 0 : i32
    %c0_i32_1 = arith.constant 0 : i32
    return %arg0, %c0_i32, %c0_i32_0 : i32, i32, i32
  }
  func.func @transform_3(%arg0: i32, %arg1: i32) -> (i32, i32) {
    %c0_i32 = arith.constant 0 : i32
    %c0_i32_0 = arith.constant 0 : i32
    return %c0_i32, %arg0 : i32, i32
  }
}

</mosaic_0001>

<llo_original>
// kernel: tpu_custom_call.1
$region0: #{tpu_custom_call.1}
  #allocation0 [shape = 'u32[]', space=smem, size = 0x4, offset = 0x4, fixed_abs, tag = 'smem constant byte address 0x4 - core index']
  #allocation1 [shape = 'u32[72,128]{1,0:T(1,128)}', space=vmem, size = 0x9000, scoped, tag = 'internal scratch']
  #allocation2 [shape = 'f32[8,128]{1,0:T(8,128)}', space=vmem, size = 0x1000, scoped, tag = 'scratch operand']
  %s0 = inlined_call_operand.hbm [shape: f32[8,128], index: 0, kind: input, shape index: {}]
  %s1 = inlined_call_operand.hbm [shape: f32[2,128,128], index: 1, kind: input, shape index: {}]
  %s2 = inlined_call_operand.hbm [shape: f32[2,1,128], index: 2, kind: input, shape index: {}]
  %s3 = inlined_call_operand.hbm [shape: f32[8,256], index: 3, kind: output, shape index: {}]
  %s4 = sld [smem:[#allocation0]]
  $region65: #{tpu_custom_call.1} parent=0
    _
  %s6 = ssub.s32 1, %s4
  %s7 = scalar_select 0, %s6, %s4
  $region1: #{tpu_custom_call.1} parent=0
    #allocation3 [shape = 'u8[4096]{0}', space=vmem, size = 0x1000, scoped, tag = 'input window, operand 0, single buffered']
    #allocation4 [shape = 's32[2]{0}', space=sflag, size = 0x8, scoped, tag = 'scoped memory for tpu_custom_call.1']
    #allocation5 [shape = 's32[2]{0}', space=sflag, size = 0x8, scoped, tag = 'scoped memory for tpu_custom_call.1']
    #allocation6 [shape = 'u8[131072]{0}', space=vmem, size = 0x20000, scoped, tag = 'input window, operand 1']
    #allocation7 [shape = 's32[2]{0}', space=sflag, size = 0x8, scoped, tag = 'scoped memory for tpu_custom_call.1']
    #allocation8 [shape = 'u8[1024]{0}', space=vmem, size = 0x400, scoped, tag = 'input window, operand 2']
    #allocation9 [shape = 'u8[8192]{0}', space=vmem, size = 0x2000, scoped, tag = 'output window, operand 0']
    %8 = vsyncpa [#allocation4], 0
    %9 = vsyncpa [#allocation7], 0
    %s10 = scalar_lea.sflag [#allocation7], 1
    %11 = vsyncpa %s10, 0
    %12 = vsyncpa [#allocation5], 0
    %s13 = scalar_lea.sflag [#allocation5], 1
    %14 = vsyncpa %s13, 0
    loop: start=0, step=1, limit=4
    $region2: #{tpu_custom_call.1} parent=1 // loop_pre_header
      _
    $region3: #{tpu_custom_call.1} parent=1 // loop_header
      %s16 = sphi 0, %s20
      %p17 = scmp.ge.s32.totalorder %s16, 4
      %s23 = sphi 0, %s35
      %s24 = sphi 0, %s31
      %s25 = sphi 0, %s23
      %s26 = sphi 0, %s24
      %s27 = sphi 0, %s25
      %s28 = sphi 0, %s26
      %s38 = sphi 0, %s40
      %s41 = sphi 0, %s38
      %s42 = sphi 0, %s41
      %s58 = sphi 0, %s42
      %s66 = sphi 0, %s68
      %s69 = sphi 0, %s66
      %s70 = sphi 0, %s69
      %s86 = sphi 0, %s70
      %s92 = sphi 0, %s94
      %s95 = sphi 0, %s92
      %s96 = sphi 0, %s95
      %s112 = sphi 0, %s96
      %s118 = sphi 0, %s120
      %s121 = sphi 0, %s118
      %s122 = sphi 0, %s121
      %s138 = sphi 0, %s122
    $region4: #{tpu_custom_call.1} parent=1 // loop_header_branch
      %19 = sbr.rel (%p17) target = $region8
    $region5: #{tpu_custom_call.1} parent=1 // loop_body
      %s21 = ssub.s32 %s16, 1
      %s22 = ssub.s32 %s16, 2
      %s29 = sadd.s32 1, %s24
      %p30 = scmp.ge.s32.totalorder %s29, 1
      %s31 = scalar_select %p30, 0, %s29
      %s32 = sadd.s32 1, %s23
      %s33 = scalar_select %p30, %s32, %s23
      %p34 = scmp.ge.s32.totalorder %s33, 2
      %s35 = scalar_select %p34, 0, %s33
      %s36 = ssub.s32 %s24, %s31
      %p37 = scmp.eq.s32.totalorder %s36, 0
      %s39 = sadd.s32 %s38, 1
      %s40 = scalar_select %p37, %s38, %s39
      %p43 = pneg %p37
      %p44 = scmp.eq.s32.totalorder %s16, 1
      %p45 = por %p43, %p44
      %p46 = scmp.ne.s32.totalorder %s38, %s41
      %p47 = scmp.eq.s32.totalorder %s16, 0
      %p48 = por %p46, %p47
      %p49 = scmp.ne.s32.totalorder %s38, %s41
      %p50 = scmp.eq.s32.totalorder %s21, 1
      %p51 = por %p49, %p50
      %p52 = scmp.ne.s32.totalorder %s41, %s42
      %p53 = scmp.eq.s32.totalorder %s21, 0
      %p54 = por %p52, %p53
      %p55 = scmp.ne.s32.totalorder %s41, %s42
      %p56 = scmp.eq.s32.totalorder %s22, 1
      %p57 = por %p55, %p56
      %p59 = scmp.ne.s32.totalorder %s42, %s58
      %p60 = scmp.eq.s32.totalorder %s22, 0
      %p61 = por %p59, %p60
      %s62 = ssub.s32 %s23, %s35
      %s63 = ssub.s32 %s24, %s31
      %s64 = sor.u32 %s62, %s63
      %p65 = scmp.eq.s32.totalorder %s64, 0
      %s67 = sadd.s32 %s66, 1
      %s68 = scalar_select %p65, %s66, %s67
      %p71 = pneg %p65
      %p72 = scmp.eq.s32.totalorder %s16, 1
      %p73 = por %p71, %p72
      %p74 = scmp.ne.s32.totalorder %s66, %s69
      %p75 = scmp.eq.s32.totalorder %s16, 0
      %p76 = por %p74, %p75
      %p77 = scmp.ne.s32.totalorder %s66, %s69
      %p78 = scmp.eq.s32.totalorder %s21, 1
      %p79 = por %p77, %p78
      %p80 = scmp.ne.s32.totalorder %s69, %s70
      %p81 = scmp.eq.s32.totalorder %s21, 0
      %p82 = por %p80, %p81
      %p83 = scmp.ne.s32.totalorder %s69, %s70
      %p84 = scmp.eq.s32.totalorder %s22, 1
      %p85 = por %p83, %p84
      %p87 = scmp.ne.s32.totalorder %s70, %s86
      %p88 = scmp.eq.s32.totalorder %s22, 0
      %p89 = por %p87, %p88
      %s90 = ssub.s32 %s23, %s35
      %p91 = scmp.eq.s32.totalorder %s90, 0
      %s93 = sadd.s32 %s92, 1
      %s94 = scalar_select %p91, %s92, %s93
      %p97 = pneg %p91
      %p98 = scmp.eq.s32.totalorder %s16, 1
      %p99 = por %p97, %p98
      %p100 = scmp.ne.s32.totalorder %s92, %s95
      %p101 = scmp.eq.s32.totalorder %s16, 0
      %p102 = por %p100, %p101
      %p103 = scmp.ne.s32.totalorder %s92, %s95
      %p104 = scmp.eq.s32.totalorder %s21, 1
      %p105 = por %p103, %p104
      %p106 = scmp.ne.s32.totalorder %s95, %s96
      %p107 = scmp.eq.s32.totalorder %s21, 0
      %p108 = por %p106, %p107
      %p109 = scmp.ne.s32.totalorder %s95, %s96
      %p110 = scmp.eq.s32.totalorder %s22, 1
      %p111 = por %p109, %p110
      %p113 = scmp.ne.s32.totalorder %s96, %s112
      %p114 = scmp.eq.s32.totalorder %s22, 0
      %p115 = por %p113, %p114
      %s116 = ssub.s32 %s23, %s35
      %p117 = scmp.eq.s32.totalorder %s116, 0
      %s119 = sadd.s32 %s118, 1
      %s120 = scalar_select %p117, %s118, %s119
      %p123 = pneg %p117
      %p124 = scmp.eq.s32.totalorder %s16, 1
      %p125 = por %p123, %p124
      %p126 = scmp.ne.s32.totalorder %s118, %s121
      %p127 = scmp.eq.s32.totalorder %s16, 0
      %p128 = por %p126, %p127
      %p129 = scmp.ne.s32.totalorder %s118, %s121
      %p130 = scmp.eq.s32.totalorder %s21, 1
      %p131 = por %p129, %p130
      %p132 = scmp.ne.s32.totalorder %s121, %s122
      %p133 = scmp.eq.s32.totalorder %s21, 0
      %p134 = por %p132, %p133
      %p135 = scmp.ne.s32.totalorder %s121, %s122
      %p136 = scmp.eq.s32.totalorder %s22, 1
      %p137 = por %p135, %p136
      %p139 = scmp.ne.s32.totalorder %s122, %s138
      %p140 = scmp.eq.s32.totalorder %s22, 0
      %p141 = por %p139, %p140
      %p142 = scmp.le.s32.totalorder 1, %s16
      %p143 = scmp.lt.s32.totalorder %s16, 3
      %p144 = pnand %p142, %p143
      %p145 = pneg %p144
      // Predicated region
      $region9: #{tpu_custom_call.1} parent=5 // pred_check
        _
      $region10: #{tpu_custom_call.1} parent=5 // pred_check_branch
        %147 = sbr.rel (%p144) target = $region12
      $region11: #{tpu_custom_call.1} parent=5 // pred_region
        %s148 = ssub.s32 %s16, 1
        // Predicated region
        $region13: #{tpu_custom_call.1} parent=11 // pred_check
          %p149 = pneg %p54
        $region14: #{tpu_custom_call.1} parent=11 // pred_check_branch
          %151 = sbr.rel (%p149) target = $region16
        $region15: #{tpu_custom_call.1} parent=11 // pred_region
          %153 = vsyncadd [#allocation4], 0
          %s154 = smul.addr %s26, 8
          %s155 = scalar_lea.hbm %s0, %s154
          %s157 = sshll.u32 %s155, 4
          %s158 = int_to_ptr.hbm [resolvable:$true] %s157
          %s159 = sshll.u32 [#allocation3], 4
          %s160 = int_to_ptr.vmem [resolvable:$true] %s159
          %162 = dma.hbm_to_vmem [thread:$0]  %s158, 128, %s160, [#allocation4]
        $region16: #{tpu_custom_call.1} parent=11 // pred_fallthru
          _
      $region12: #{tpu_custom_call.1} parent=5 // pred_fallthru
        _
      %p163 = scmp.lt.s32.totalorder %s16, 2
      // Predicated region
      $region17: #{tpu_custom_call.1} parent=5 // pred_check
        %p164 = pneg %p163
      $region18: #{tpu_custom_call.1} parent=5 // pred_check_branch
        %166 = sbr.rel (%p164) target = $region20
      $region19: #{tpu_custom_call.1} parent=5 // pred_region
        // Predicated region
        $region21: #{tpu_custom_call.1} parent=19 // pred_check
          %p167 = pneg %p76
        $region22: #{tpu_custom_call.1} parent=19 // pred_check_branch
          %169 = sbr.rel (%p167) target = $region24
        $region23: #{tpu_custom_call.1} parent=19 // pred_region
          %s170 = sand.u32 %s16, 1
          %s171 = scalar_lea.sflag [#allocation7], %s170
          %s172 = sand.u32 %s66, 1
          %s173 = smul.addr %s172, 128
          %s174 = scalar_lea.vmem [#allocation6], %s173
          %s175 = smul.u32 16, %s24
          %177 = vsyncadd %s171, 0
          %s178 = smul.addr %s23, 16
          %s179 = sadd.s32 %s175, %s178
          %s180 = smul.addr %s179, 8
          %s181 = scalar_lea.hbm %s1, %s180
          %s182 = sshll.u32 %s181, 4
          %s183 = int_to_ptr.hbm [resolvable:$true] %s182
          %s184 = sshll.u32 %s174, 4
          %s185 = int_to_ptr.vmem [resolvable:$true] %s184
          %190 = dma.hbm_to_vmem [thread:$0]  %s183, 2048, %s185, %s171, 128, 128, 8
        $region24: #{tpu_custom_call.1} parent=19 // pred_fallthru
          _
        // Predicated region
        $region25: #{tpu_custom_call.1} parent=19 // pred_check
          %p191 = pneg %p102
        $region26: #{tpu_custom_call.1} parent=19 // pred_check_branch
          %193 = sbr.rel (%p191) target = $region28
        $region27: #{tpu_custom_call.1} parent=19 // pred_region
          %s194 = sand.u32 %s16, 1
          %s195 = scalar_lea.sflag [#allocation7], %s194
          %s196 = sand.u32 %s92, 1
          %s197 = scalar_lea.vmem [#allocation8], %s196
          %199 = vsyncadd %s195, 0
          %s200 = scalar_lea.hbm %s2, %s23
          %s202 = sshll.u32 %s200, 4
          %s203 = int_to_ptr.hbm [resolvable:$true] %s202
          %s204 = sshll.u32 %s197, 4
          %s205 = int_to_ptr.vmem [resolvable:$true] %s204
          %207 = dma.hbm_to_vmem [thread:$0]  %s203, 16, %s205, %s195
        $region28: #{tpu_custom_call.1} parent=19 // pred_fallthru
          _
      $region20: #{tpu_custom_call.1} parent=5 // pred_fallthru
        _
      %p208 = scmp.le.s32.totalorder 1, %s16
      %p209 = scmp.lt.s32.totalorder %s16, 3
      %p210 = pnand %p208, %p209
      %p211 = pneg %p210
      // Predicated region
      $region29: #{tpu_custom_call.1} parent=5 // pred_check
        _
      $region30: #{tpu_custom_call.1} parent=5 // pred_check_branch
        %213 = sbr.rel (%p210) target = $region32
      $region31: #{tpu_custom_call.1} parent=5 // pred_region
        %s214 = ssub.s32 %s16, 1
        // Predicated region
        $region33: #{tpu_custom_call.1} parent=31 // pred_check
          %p215 = pneg %p54
        $region34: #{tpu_custom_call.1} parent=31 // pred_check_branch
          %217 = sbr.rel (%p215) target = $region36
        $region35: #{tpu_custom_call.1} parent=31 // pred_region
          %219 = dma.done [#allocation4], 128
        $region36: #{tpu_custom_call.1} parent=31 // pred_fallthru
          _
        %s220 = sand.u32 %s21, 1
        %s221 = scalar_lea.sflag [#allocation7], %s220
        %s222 = sand.u32 %s69, 1
        %s223 = smul.addr %s222, 128
        %s224 = scalar_lea.vmem [#allocation6], %s223
        // Predicated region
        $region37: #{tpu_custom_call.1} parent=31 // pred_check
          %p225 = pneg %p82
        $region38: #{tpu_custom_call.1} parent=31 // pred_check_branch
          %227 = sbr.rel (%p225) target = $region40
        $region39: #{tpu_custom_call.1} parent=31 // pred_region
          %229 = dma.done %s221, 2048
        $region40: #{tpu_custom_call.1} parent=31 // pred_fallthru
          _
        %s230 = sand.u32 %s21, 1
        %s231 = scalar_lea.sflag [#allocation7], %s230
        %s232 = sand.u32 %s95, 1
        %s233 = scalar_lea.vmem [#allocation8], %s232
        // Predicated region
        $region41: #{tpu_custom_call.1} parent=31 // pred_check
          %p234 = pneg %p108
        $region42: #{tpu_custom_call.1} parent=31 // pred_check_branch
          %236 = sbr.rel (%p234) target = $region44
        $region43: #{tpu_custom_call.1} parent=31 // pred_region
          %238 = dma.done %s231, 16
        $region44: #{tpu_custom_call.1} parent=31 // pred_fallthru
          _
        %p239 = pneg %p54
        %p240 = pneg %p51
        %s241 = sand.u32 %s21, 1
        %s242 = scalar_lea.sflag [#allocation7], %s241
        %s243 = sand.u32 %s69, 1
        %s244 = smul.addr %s243, 128
        %s245 = scalar_lea.vmem [#allocation6], %s244
        %p246 = pneg %p82
        %p247 = pneg %p79
        %s248 = sand.u32 %s21, 1
        %s249 = scalar_lea.sflag [#allocation7], %s248
        %s250 = sand.u32 %s95, 1
        %s251 = scalar_lea.vmem [#allocation8], %s250
        %p252 = pneg %p108
        %p253 = pneg %p105
        %p254 = pneg %p134
        %p255 = pneg %p131
        %s256 = sand.u32 %s121, 1
        %s257 = scalar_lea.sflag [#allocation5], %s256
        %s258 = sand.u32 %s121, 1
        %s259 = smul.addr %s258, 8
        %s260 = scalar_lea.vmem [#allocation9], %s259
        %s261 = smul.u32 16, %s26
        %p262 = scmp.eq.s32.totalorder %s26, 0
        // Predicated region
        $region45: #{tpu_custom_call.1} parent=31 // pred_check
          %p263 = pneg %p262
        $region46: #{tpu_custom_call.1} parent=31 // pred_check_branch
          %265 = sbr.rel (%p263) target = $region48
        $region47: #{tpu_custom_call.1} parent=31 // pred_region
          %266 = vst [vmem:[#allocation2] sm:$0xff] 0.0
        $region48: #{tpu_custom_call.1} parent=31 // pred_fallthru
          _
        %v267 = vld [vmem:[#allocation2] sm:$0xff]
        %v268 = vld [vmem:[#allocation3] sm:$0xff]
        %v269 = vld [vmem:[%s224] sm:$0xff]
        %v270 = vld [vmem:[%s224 + $0x8] sm:$0xff]
        %v271 = vld [vmem:[%s224 + $0x10] sm:$0xff]
        %v272 = vld [vmem:[%s224 + $0x18] sm:$0xff]
        %v273 = vld [vmem:[%s224 + $0x20] sm:$0xff]
        %v274 = vld [vmem:[%s224 + $0x28] sm:$0xff]
        %v275 = vld [vmem:[%s224 + $0x30] sm:$0xff]
        %v276 = vld [vmem:[%s224 + $0x38] sm:$0xff]
        %v277 = vld [vmem:[%s224 + $0x40] sm:$0xff]
        %v278 = vld [vmem:[%s224 + $0x48] sm:$0xff]
        %v279 = vld [vmem:[%s224 + $0x50] sm:$0xff]
        %v280 = vld [vmem:[%s224 + $0x58] sm:$0xff]
        %v281 = vld [vmem:[%s224 + $0x60] sm:$0xff]
        %v282 = vld [vmem:[%s224 + $0x68] sm:$0xff]
        %v283 = vld [vmem:[%s224 + $0x70] sm:$0xff]
        %v284 = vld [vmem:[%s224 + $0x78] sm:$0xff]
        %285 = vmatpush.msra.mxu0 %v284
        %286 = vmatpush.msra.mxu0 %v283
        %287 = vmatpush.msra.mxu0 %v282
        %288 = vmatpush.msra.mxu0 %v281
        %289 = vmatpush.msra.mxu0 %v280
        %290 = vmatpush.msra.mxu0 %v279
        %291 = vmatpush.msra.mxu0 %v278
        %292 = vmatpush.msra.mxu0 %v277
        %293 = vmatpush.msra.mxu0 %v276
        %294 = vmatpush.msra.mxu0 %v275
        %295 = vmatpush.msra.mxu0 %v274
        %296 = vmatpush.msra.mxu0 %v273
        %297 = vmatpush.msra.mxu0 %v272
        %298 = vmatpush.msra.mxu0 %v271
        %299 = vmatpush.msra.mxu0 %v270
        %300 = vmatpush.msra.mxu0 %v269
        %301 = vmatmul.f32.gmra.mxu0 %v268
        %v302 = vpop.f32.mrf.mxu0
        %v303 = vadd.f32 0.0, %v302
        %304 = vdwg.mxu0
        %v305 = vadd.f32 %v267, %v303
        %306 = vst [vmem:[#allocation2] sm:$0xff] %v305
        // Predicated region
        $region49: #{tpu_custom_call.1} parent=31 // pred_check
          %p307 = pneg %p262
        $region50: #{tpu_custom_call.1} parent=31 // pred_check_branch
          %309 = sbr.rel (%p307) target = $region52
        $region51: #{tpu_custom_call.1} parent=31 // pred_region
          %v310 = vld [vmem:[#allocation2] sm:$0xff]
          %v311 = vld [vmem:[%s233] sm:$0x1]
          %v313 = vperm.slane %v311, 0
          %v315 = vadd.f32 %v310, %v313
          %316 = vst [vmem:[%s260] sm:$0xff] %v315
        $region52: #{tpu_custom_call.1} parent=31 // pred_fallthru
          _
        %s317 = sand.u32 %s121, 1
        %s318 = scalar_lea.sflag [#allocation5], %s317
        %s319 = sand.u32 %s121, 1
        %s320 = smul.addr %s319, 8
        %s321 = scalar_lea.vmem [#allocation9], %s320
        // Predicated region
        $region53: #{tpu_custom_call.1} parent=31 // pred_check
          %p322 = pneg %p131
        $region54: #{tpu_custom_call.1} parent=31 // pred_check_branch
          %324 = sbr.rel (%p322) target = $region56
        $region55: #{tpu_custom_call.1} parent=31 // pred_region
          %326 = vsyncadd %s318, 0
          %s327 = smul.addr %s25, 8
          %s328 = scalar_lea.hbm %s3, %s327
          %s330 = sshll.u32 %s321, 4
          %s331 = int_to_ptr.vmem [resolvable:$true] %s330
          %s332 = sshll.u32 %s328, 4
          %s333 = int_to_ptr.hbm [resolvable:$true] %s332
          %335 = dma.vmem_to_hbm [thread:$0]  %s331, 128, %s333, %s318
        $region56: #{tpu_custom_call.1} parent=31 // pred_fallthru
          _
      $region32: #{tpu_custom_call.1} parent=5 // pred_fallthru
        _
      %p336 = scmp.le.s32.totalorder 2, %s16
      // Predicated region
      $region57: #{tpu_custom_call.1} parent=5 // pred_check
        %p337 = pneg %p336
      $region58: #{tpu_custom_call.1} parent=5 // pred_check_branch
        %339 = sbr.rel (%p337) target = $region60
      $region59: #{tpu_custom_call.1} parent=5 // pred_region
        %s340 = ssub.s32 %s16, 2
        // Predicated region
        $region61: #{tpu_custom_call.1} parent=59 // pred_check
          %p341 = pneg %p137
        $region62: #{tpu_custom_call.1} parent=59 // pred_check_branch
          %343 = sbr.rel (%p341) target = $region64
        $region63: #{tpu_custom_call.1} parent=59 // pred_region
          %s344 = sand.u32 %s122, 1
          %s345 = scalar_lea.sflag [#allocation5], %s344
          %s346 = sand.u32 %s122, 1
          %s347 = smul.addr %s346, 8
          %s348 = scalar_lea.vmem [#allocation9], %s347
          %350 = dma.done %s345, 128
        $region64: #{tpu_custom_call.1} parent=59 // pred_fallthru
          _
      $region60: #{tpu_custom_call.1} parent=5 // pred_fallthru
        _
    $region6: #{tpu_custom_call.1} parent=1 // loop_footer
      %s20 = sadd.s32 1, %s16
    $region7: #{tpu_custom_call.1} parent=1 // loop_footer_branch
      %15 = sbr.rel target = $region3
    $region8: #{tpu_custom_call.1} parent=1 // loop_exit
      _
    %351 = vsyncpa [#allocation4], 1
    %s352 = scalar_lea.sflag [#allocation4], 1
    %353 = vsyncpa %s352, 1
    %354 = vsyncpa [#allocation7], 1
    %s355 = scalar_lea.sflag [#allocation7], 1
    %356 = vsyncpa %s355, 1
    %357 = vsyncpa [#allocation5], 1
    %s358 = scalar_lea.sflag [#allocation5], 1
    %359 = vsyncpa %s358, 1

</llo_original>
